<compile_context>
chip_gen: v7x
topology: tpu7x:2x2x1
jax: 0.10.0
libtpu: 0.0.40
codegen_flags: <defaults>
</compile_context>

<pallas_src>
import math

import jax
import jax.numpy as jnp
from jax import lax
from jax.experimental import pallas as pl
from jax.experimental.pallas import tpu as pltpu

BN_EPS = 1e-5
_INV_SQRT2 = 1.0 / math.sqrt(2.0)


def _round_up(x, m):
    return (x + m - 1) // m * m


def _px_gen_kernel(z_ref, w1_ref, aux_ref, w2_ref, o_ref):
    hid = w1_ref.shape[1]        # padded hidden width (multiple of 128)
    out_w = o_ref.shape[1]       # padded output width (multiple of 128)

    # ---- Linear 1 (bias b1 folded away: training-mode BN batch stats cancel it exactly)
    z = z_ref[...].astype(jnp.bfloat16)
    h = jnp.dot(z, w1_ref[...], preferred_element_type=jnp.float32)

    # ---- BatchNorm1d: single-pass batch stats (biased var), f32 math
    inv_b = 1.0 / h.shape[0]
    mean = jnp.sum(h, axis=0, keepdims=True) * inv_b
    ex2 = jnp.sum(h * h, axis=0, keepdims=True) * inv_b
    var = jnp.maximum(ex2 - mean * mean, 0.0)

    gamma = aux_ref[0:1, :hid]
    beta = aux_ref[1:2, :hid]
    h_bn = (h - mean) * (lax.rsqrt(var + BN_EPS) * gamma) + beta

    # ---- GELU, exact erf form (matches nn.GELU default)
    g = 0.5 * h_bn * (1.0 + lax.erf(h_bn * _INV_SQRT2))

    # ---- Linear 2 (no norm / act); lane-dense padded output, b2 lives in aux row 2
    out = jnp.dot(g.astype(jnp.bfloat16), w2_ref[...], preferred_element_type=jnp.float32)
    o_ref[...] = (out + aux_ref[2:3, :out_w]).astype(o_ref.dtype)


def px_generation_mlp(z, params):
    """z: [B, in_dim] float32.  params: dict with w1/b1/gamma/beta/w2/b2 (see init_params)."""
    B, in_dim = z.shape
    w1, w2 = params["w1"], params["w2"]
    hid, out_dim = w1.shape[1], w2.shape[1]

    hid_p = _round_up(hid, 128)
    out_p = _round_up(out_dim, 128)
    aux_w = max(hid_p, out_p)

    # Zero-padding keeps padded features exactly zero through BN/GELU/matmul.
    w1_p = jnp.pad(w1, ((0, 0), (0, hid_p - hid))).astype(jnp.bfloat16)
    w2_p = jnp.pad(w2, ((0, hid_p - hid), (0, out_p - out_dim))).astype(jnp.bfloat16)

    # Pack gamma / beta / b2 into one (8, aux_w) f32 operand (rows 0,1,2; rest zero).
    aux = jnp.zeros((8, aux_w), jnp.float32)
    aux = aux.at[0, :hid].set(params["gamma"].reshape(-1))
    aux = aux.at[1, :hid].set(params["beta"].reshape(-1))
    aux = aux.at[2, :out_dim].set(params["b2"].reshape(-1))

    flops = 2 * B * (in_dim * hid_p + hid_p * out_p)
    bytes_accessed = (z.size * 4 + w1_p.size * 2 + aux.size * 4
                      + w2_p.size * 2 + B * out_p * 4)

    vmem = pl.BlockSpec(memory_space=pltpu.MemorySpace.VMEM)
    out = pl.pallas_call(
        _px_gen_kernel,
        out_shape=jax.ShapeDtypeStruct((B, out_p), jnp.float32),
        in_specs=[vmem, vmem, vmem, vmem],
        out_specs=vmem,
        cost_estimate=pl.CostEstimate(
            flops=flops, transcendentals=B * hid_p, bytes_accessed=bytes_accessed),
    )(z, w1_p, aux, w2_p)

    return out[:, :out_dim]


def init_params(key, in_dim, hidden_dim, out_dim):
    """PyTorch-like Linear init (uniform +/- 1/sqrt(fan_in)); non-trivial BN affine."""
    k1, k2, k3, k4, k5, k6 = jax.random.split(key, 6)
    bound1 = 1.0 / math.sqrt(in_dim)
    bound2 = 1.0 / math.sqrt(hidden_dim)
    return {
        # weights stored as [in, out] (transposed vs. PyTorch's [out, in])
        "w1": jax.random.uniform(k1, (in_dim, hidden_dim), jnp.float32, -bound1, bound1),
        # b1 is kept for reference fidelity but is provably cancelled by the BN batch
        # statistics, so it is not passed to the kernel.
        "b1": jax.random.uniform(k2, (1, hidden_dim), jnp.float32, -bound1, bound1),
        "gamma": jax.random.uniform(k5, (1, hidden_dim), jnp.float32, 0.5, 1.5),
        "beta": 0.1 * jax.random.normal(k6, (1, hidden_dim), jnp.float32),
        "w2": jax.random.uniform(k3, (hidden_dim, out_dim), jnp.float32, -bound2, bound2),
        "b2": jax.random.uniform(k4, (1, out_dim), jnp.float32, -bound2, bound2),
    }


def _reference_matched(z, p):
    """Mirrors the kernel's compute (bf16 at the dot boundary, f32 elsewhere), keeps b1."""
    h = jnp.dot(z.astype(jnp.bfloat16), p["w1"].astype(jnp.bfloat16),
                preferred_element_type=jnp.float32) + p["b1"]
    mean = jnp.mean(h, axis=0, keepdims=True)
    var = jnp.mean((h - mean) ** 2, axis=0, keepdims=True)
    h = (h - mean) / jnp.sqrt(var + BN_EPS) * p["gamma"] + p["beta"]
    h = 0.5 * h * (1.0 + lax.erf(h * _INV_SQRT2))
    return jnp.dot(h.astype(jnp.bfloat16), p["w2"].astype(jnp.bfloat16),
                   preferred_element_type=jnp.float32) + p["b2"]


def _reference_f32(z, p):
    """Pure-f32, PyTorch-faithful reference (loose-tolerance semantic check)."""
    h = z @ p["w1"] + p["b1"]
    mean = jnp.mean(h, axis=0, keepdims=True)
    var = jnp.mean((h - mean) ** 2, axis=0, keepdims=True)
    h = (h - mean) / jnp.sqrt(var + BN_EPS) * p["gamma"] + p["beta"]
    h = 0.5 * h * (1.0 + lax.erf(h * _INV_SQRT2))
    return h @ p["w2"] + p["b2"]


if __name__ == "__main__":
    key = jax.random.PRNGKey(0)
    k_in, k_param = jax.random.split(key)

    B, in_dim, hidden_dim, out_dim = 8, 32, 512, 64  # hidden_dim=[512] per module default
    z = jax.random.normal(k_in, (B, in_dim), jnp.float32)
    params = init_params(k_param, in_dim, hidden_dim, out_dim)

    out = jax.block_until_ready(px_generation_mlp(z, params))
    assert out.shape == (B, out_dim)

    ref_matched = _reference_matched(z, params)   # same bf16-boundary compute
    ref_f32 = _reference_f32(z, params)           # exact PyTorch-f32 semantics

    assert jnp.allclose(out, ref_matched, atol=2e-3, rtol=2e-3), "mismatch vs matched reference"
    assert jnp.allclose(out, ref_f32, atol=5e-2, rtol=5e-2), "mismatch vs f32 reference"

    print("KERNEL_OK")
</pallas_src>

<mosaic_0001>
module attributes {stable_mosaic.version = 11 : i64} {
  func.func @_px_gen_kernel(%arg0: memref<8x32xf32, #tpu.memory_space<vmem>>, %arg1: memref<32x512xbf16, #tpu.memory_space<vmem>>, %arg2: memref<8x512xf32, #tpu.memory_space<vmem>>, %arg3: memref<512x128xbf16, #tpu.memory_space<vmem>>, %arg4: memref<8x128xf32, #tpu.memory_space<vmem>>) attributes {dimension_semantics = [], scalar_prefetch = 0 : i64, scratch_operands = 0 : i64, tpu.core_type = #tpu.core_type<tc>} {
    %c0 = arith.constant 0 : index
    %c0_0 = arith.constant 0 : index
    %0 = vector.load %arg0[%c0, %c0_0] : memref<8x32xf32, #tpu.memory_space<vmem>>, vector<8x32xf32>
    %1 = arith.truncf %0 : vector<8x32xf32> to vector<8x32xbf16>
    %c0_1 = arith.constant 0 : index
    %c0_2 = arith.constant 0 : index
    %2 = vector.load %arg1[%c0_1, %c0_2] : memref<32x512xbf16, #tpu.memory_space<vmem>>, vector<32x512xbf16>
    %cst = arith.constant dense<0.000000e+00> : vector<8x512xf32>
    %3 = tpu.matmul %1, %2, %cst {dimension_numbers = #tpu.dot_dimension_numbers<[1], [0], [0], [1], [0, 0, 1, 1], [], []>} : vector<8x32xbf16>, vector<32x512xbf16>, vector<8x512xf32> -> vector<8x512xf32>
    %cst_3 = arith.constant dense<0.000000e+00> : vector<512xf32>
    %4 = vector.multi_reduction <add>, %3, %cst_3 [0] : vector<8x512xf32> to vector<512xf32>
    %5 = vector.shape_cast %4 : vector<512xf32> to vector<1x512xf32>
    %cst_4 = arith.constant 1.250000e-01 : f32
    %6 = vector.broadcast %cst_4 : f32 to vector<1x512xf32>
    %7 = arith.mulf %5, %6 : vector<1x512xf32>
    %8 = arith.mulf %3, %3 : vector<8x512xf32>
    %cst_5 = arith.constant dense<0.000000e+00> : vector<512xf32>
    %9 = vector.multi_reduction <add>, %8, %cst_5 [0] : vector<8x512xf32> to vector<512xf32>
    %10 = vector.shape_cast %9 : vector<512xf32> to vector<1x512xf32>
    %cst_6 = arith.constant 1.250000e-01 : f32
    %11 = vector.broadcast %cst_6 : f32 to vector<1x512xf32>
    %12 = arith.mulf %10, %11 : vector<1x512xf32>
    %13 = arith.mulf %7, %7 : vector<1x512xf32>
    %14 = arith.subf %12, %13 : vector<1x512xf32>
    %cst_7 = arith.constant 0.000000e+00 : f32
    %15 = vector.broadcast %cst_7 : f32 to vector<1x512xf32>
    %16 = arith.maximumf %14, %15 : vector<1x512xf32>
    %c0_8 = arith.constant 0 : index
    %c0_9 = arith.constant 0 : index
    %17 = vector.load %arg2[%c0_8, %c0_9] : memref<8x512xf32, #tpu.memory_space<vmem>>, vector<1x512xf32>
    %c1 = arith.constant 1 : index
    %c0_10 = arith.constant 0 : index
    %18 = vector.load %arg2[%c1, %c0_10] : memref<8x512xf32, #tpu.memory_space<vmem>>, vector<1x512xf32>
    %19 = vector.broadcast %7 : vector<1x512xf32> to vector<8x512xf32>
    %20 = arith.subf %3, %19 : vector<8x512xf32>
    %cst_11 = arith.constant 9.99999974E-6 : f32
    %21 = vector.broadcast %cst_11 : f32 to vector<1x512xf32>
    %22 = arith.addf %16, %21 : vector<1x512xf32>
    %23 = math.rsqrt %22 : vector<1x512xf32>
    %24 = arith.mulf %23, %17 : vector<1x512xf32>
    %25 = vector.broadcast %24 : vector<1x512xf32> to vector<8x512xf32>
    %26 = arith.mulf %20, %25 : vector<8x512xf32>
    %27 = vector.broadcast %18 : vector<1x512xf32> to vector<8x512xf32>
    %28 = arith.addf %26, %27 : vector<8x512xf32>
    %cst_12 = arith.constant 5.000000e-01 : f32
    %29 = vector.broadcast %cst_12 : f32 to vector<8x512xf32>
    %30 = arith.mulf %29, %28 : vector<8x512xf32>
    %cst_13 = arith.constant 0.707106769 : f32
    %31 = vector.broadcast %cst_13 : f32 to vector<8x512xf32>
    %32 = arith.mulf %28, %31 : vector<8x512xf32>
    %33 = math.erf %32 : vector<8x512xf32>
    %cst_14 = arith.constant 1.000000e+00 : f32
    %34 = vector.broadcast %cst_14 : f32 to vector<8x512xf32>
    %35 = arith.addf %34, %33 : vector<8x512xf32>
    %36 = arith.mulf %30, %35 : vector<8x512xf32>
    %37 = arith.truncf %36 : vector<8x512xf32> to vector<8x512xbf16>
    %c0_15 = arith.constant 0 : index
    %c0_16 = arith.constant 0 : index
    %38 = vector.load %arg3[%c0_15, %c0_16] : memref<512x128xbf16, #tpu.memory_space<vmem>>, vector<512x128xbf16>
    %cst_17 = arith.constant dense<0.000000e+00> : vector<8x128xf32>
    %39 = tpu.matmul %37, %38, %cst_17 {dimension_numbers = #tpu.dot_dimension_numbers<[1], [0], [0], [1], [0, 0, 1, 1], [], []>} : vector<8x512xbf16>, vector<512x128xbf16>, vector<8x128xf32> -> vector<8x128xf32>
    %c2 = arith.constant 2 : index
    %c0_18 = arith.constant 0 : index
    %40 = vector.load %arg2[%c2, %c0_18] : memref<8x512xf32, #tpu.memory_space<vmem>>, vector<1x128xf32>
    %41 = vector.broadcast %40 : vector<1x128xf32> to vector<8x128xf32>
    %42 = arith.addf %39, %41 : vector<8x128xf32>
    %c0_19 = arith.constant 0 : index
    %c0_20 = arith.constant 0 : index
    %43 = vector.load %arg4[%c0_19, %c0_20] : memref<8x128xf32, #tpu.memory_space<vmem>>, vector<8x128xf32>
    tpu.vector_store %arg4[%c0_19, %c0_20], %42 {strides = array<i32>} : memref<8x128xf32, #tpu.memory_space<vmem>>, vector<8x128xf32>,
    return
  }
}

</mosaic_0001>

<llo_original>
// kernel: tpu_custom_call.1
$region0: #{tpu_custom_call.1}
  #allocation0 [shape = 'u32[]', space=smem, size = 0x4, offset = 0x4, fixed_abs, tag = 'smem constant byte address 0x4 - core index']
  #allocation1 [shape = 'u32[144,128]{1,0:T(1,128)}', space=vmem, size = 0x12000, scoped, tag = 'internal scratch']
  %s0 = inlined_call_operand.hbm [shape: f32[8,32], index: 0, kind: input, shape index: {}]
  %s1 = inlined_call_operand.hbm [shape: bf16[32,512], index: 1, kind: input, shape index: {}]
  %s2 = inlined_call_operand.hbm [shape: f32[8,512], index: 2, kind: input, shape index: {}]
  %s3 = inlined_call_operand.hbm [shape: bf16[512,128], index: 3, kind: input, shape index: {}]
  %s4 = inlined_call_operand.hbm [shape: f32[8,128], index: 4, kind: output, shape index: {}]
  %s5 = sld [smem:[#allocation0]]
  $region42: #{tpu_custom_call.1} parent=0
    _
  %s7 = ssub.s32 1, %s5
  %s8 = scalar_select 0, %s7, %s5
  $region1: #{tpu_custom_call.1} parent=0
    #allocation2 [shape = 'u8[4096]{0}', space=vmem, size = 0x1000, scoped, tag = 'input window, operand 0, single buffered']
    #allocation3 [shape = 's32[1]{0}', space=sflag, size = 0x4, scoped, tag = 'scoped memory for tpu_custom_call.1']
    #allocation4 [shape = 's32[1]{0}', space=sflag, size = 0x4, scoped, tag = 'scoped memory for tpu_custom_call.1']
    #allocation5 [shape = 'u8[32768]{0}', space=vmem, size = 0x8000, scoped, tag = 'input window, operand 1, single buffered']
    #allocation6 [shape = 's32[1]{0}', space=sflag, size = 0x4, scoped, tag = 'scoped memory for tpu_custom_call.1']
    #allocation7 [shape = 'u8[16384]{0}', space=vmem, size = 0x4000, scoped, tag = 'input window, operand 2, single buffered']
    #allocation8 [shape = 'u8[131072]{0}', space=vmem, size = 0x20000, scoped, tag = 'input window, operand 3, single buffered']
    #allocation9 [shape = 's32[1]{0}', space=sflag, size = 0x4, scoped, tag = 'scoped memory for tpu_custom_call.1']
    #allocation10 [shape = 'u8[4096]{0}', space=vmem, size = 0x1000, scoped, tag = 'output window, operand 0, single buffered']
    %9 = vsyncpa [#allocation3], 0
    %10 = vsyncpa [#allocation6], 0
    %11 = vsyncpa [#allocation9], 0
    %12 = vsyncpa [#allocation4], 0
    // Predicated region
    $region2: #{tpu_custom_call.1} parent=1 // pred_check
      _
    $region3: #{tpu_custom_call.1} parent=1 // pred_check_branch
      %14 = sbr.rel (0) target = $region5
    $region4: #{tpu_custom_call.1} parent=1 // pred_region
      %s16 = ssub.s32 128, 128
      %17 = vsyncadd [#allocation3], %s16
      %s19 = sshll.u32 [#allocation2], 4
      %s20 = int_to_ptr.vmem [resolvable:$true] %s19
      %22 = dma.hbm_to_vmem [thread:$0]  %s0, 128, %s20, [#allocation3]
    $region5: #{tpu_custom_call.1} parent=1 // pred_fallthru
      _
    // Predicated region
    $region6: #{tpu_custom_call.1} parent=1 // pred_check
      _
    $region7: #{tpu_custom_call.1} parent=1 // pred_check_branch
      %24 = sbr.rel (0) target = $region9
    $region8: #{tpu_custom_call.1} parent=1 // pred_region
      %s26 = ssub.s32 1024, 1024
      %27 = vsyncadd [#allocation6], %s26
      %s28 = sshll.u32 [#allocation5], 4
      %s29 = int_to_ptr.vmem [resolvable:$true] %s28
      %34 = dma.hbm_to_vmem [thread:$0]  %s1, 1024, %s29, [#allocation6], 256, 256, 16
    $region9: #{tpu_custom_call.1} parent=1 // pred_fallthru
      _
    // Predicated region
    $region10: #{tpu_custom_call.1} parent=1 // pred_check
      _
    $region11: #{tpu_custom_call.1} parent=1 // pred_check_branch
      %36 = sbr.rel (0) target = $region13
    $region12: #{tpu_custom_call.1} parent=1 // pred_region
      %s38 = ssub.s32 512, 512
      %39 = vsyncadd [#allocation6], %s38
      %s41 = sshll.u32 [#allocation7], 4
      %s42 = int_to_ptr.vmem [resolvable:$true] %s41
      %44 = dma.hbm_to_vmem [thread:$0]  %s2, 512, %s42, [#allocation6]
    $region13: #{tpu_custom_call.1} parent=1 // pred_fallthru
      _
    // Predicated region
    $region14: #{tpu_custom_call.1} parent=1 // pred_check
      _
    $region15: #{tpu_custom_call.1} parent=1 // pred_check_branch
      %46 = sbr.rel (0) target = $region17
    $region16: #{tpu_custom_call.1} parent=1 // pred_region
      %s48 = ssub.s32 4096, 4096
      %49 = vsyncadd [#allocation9], %s48
      %s50 = sshll.u32 [#allocation8], 4
      %s51 = int_to_ptr.vmem [resolvable:$true] %s50
      %56 = dma.hbm_to_vmem [thread:$0]  %s3, 4096, %s51, [#allocation9], 64, 64, 4
    $region17: #{tpu_custom_call.1} parent=1 // pred_fallthru
      _
    // Predicated region
    $region18: #{tpu_custom_call.1} parent=1 // pred_check
      _
    $region19: #{tpu_custom_call.1} parent=1 // pred_check_branch
      %58 = sbr.rel (0) target = $region21
    $region20: #{tpu_custom_call.1} parent=1 // pred_region
      %59 = dma.done [#allocation3], 128
    $region21: #{tpu_custom_call.1} parent=1 // pred_fallthru
      _
    // Predicated region
    $region22: #{tpu_custom_call.1} parent=1 // pred_check
      _
    $region23: #{tpu_custom_call.1} parent=1 // pred_check_branch
      %61 = sbr.rel (0) target = $region25
    $region24: #{tpu_custom_call.1} parent=1 // pred_region
      %62 = dma.done [#allocation6], 1024
    $region25: #{tpu_custom_call.1} parent=1 // pred_fallthru
      _
    // Predicated region
    $region26: #{tpu_custom_call.1} parent=1 // pred_check
      _
    $region27: #{tpu_custom_call.1} parent=1 // pred_check_branch
      %64 = sbr.rel (0) target = $region29
    $region28: #{tpu_custom_call.1} parent=1 // pred_region
      %65 = dma.done [#allocation6], 512
    $region29: #{tpu_custom_call.1} parent=1 // pred_fallthru
      _
    // Predicated region
    $region30: #{tpu_custom_call.1} parent=1 // pred_check
      _
    $region31: #{tpu_custom_call.1} parent=1 // pred_check_branch
      %67 = sbr.rel (0) target = $region33
    $region32: #{tpu_custom_call.1} parent=1 // pred_region
      %68 = dma.done [#allocation9], 4096
    $region33: #{tpu_custom_call.1} parent=1 // pred_fallthru
      _
    %v70 = vld [vmem:[#allocation2] sm:$0xff]
    %v71 = vpack.c.bf16 %v70, %v70
    %v72 = vld [vmem:[#allocation5] sm:$0xff]
    %v73 = vld [vmem:[#allocation5 + $0x8] sm:$0xff]
    %v74 = vld [vmem:[#allocation5 + $0x10] sm:$0xff]
    %v75 = vld [vmem:[#allocation5 + $0x18] sm:$0xff]
    %v76 = vld [vmem:[#allocation5 + $0x20] sm:$0xff]
    %v77 = vld [vmem:[#allocation5 + $0x28] sm:$0xff]
    %v78 = vld [vmem:[#allocation5 + $0x30] sm:$0xff]
    %v79 = vld [vmem:[#allocation5 + $0x38] sm:$0xff]
    %v88 = vunpack.c.l.b16 %v72
    %v89 = vunpack.c.h.b16 %v72
    %v90 = vunpack.c.l.b16 %v73
    %v91 = vunpack.c.h.b16 %v73
    %v92 = vunpack.c.l.b16 %v74
    %v93 = vunpack.c.h.b16 %v74
    %v94 = vunpack.c.l.b16 %v75
    %v95 = vunpack.c.h.b16 %v75
    %v96 = vunpack.c.l.b16 %v76
    %v97 = vunpack.c.h.b16 %v76
    %v98 = vunpack.c.l.b16 %v77
    %v99 = vunpack.c.h.b16 %v77
    %v100 = vunpack.c.l.b16 %v78
    %v101 = vunpack.c.h.b16 %v78
    %v102 = vunpack.c.l.b16 %v79
    %v103 = vunpack.c.h.b16 %v79
    %v104 = vpack.c.b16 %v92, %v88
    %v105 = vpack.c.b16 %v93, %v89
    %v106 = vpack.c.b16 %v94, %v90
    %v107 = vpack.c.b16 %v95, %v91
    %v108 = vpack.c.b16 %v100, %v96
    %v109 = vpack.c.b16 %v101, %v97
    %v110 = vpack.c.b16 %v102, %v98
    %v111 = vpack.c.b16 %v103, %v99
    %vm120 = vcmask 261120
    %v122 = vsel %vm120, %v71, 0
    %124 = vmatprep.subr.bf16.mxu0 %v105
    %125 = vmatpush1.bf16.msra.mxu0 %v104
    %126 = vmatprep.subr.bf16.mxu0 %v109
    %127 = vmatpush1.bf16.msra.mxu0 %v108
    %128 = vmatprep.subr.bf16.mxu0 0
    %129 = vmatpush1.bf16.msra.mxu0 0
    %130 = vmatprep.subr.bf16.mxu0 0
    %131 = vmatpush1.bf16.msra.mxu0 0
    %132 = vmatprep.subr.bf16.mxu0 0
    %133 = vmatpush1.bf16.msra.mxu0 0
    %134 = vmatprep.subr.bf16.mxu0 0
    %135 = vmatpush1.bf16.msra.mxu0 0
    %136 = vmatprep.subr.bf16.mxu0 0
    %137 = vmatpush1.bf16.msra.mxu0 0
    %138 = vmatprep.subr.bf16.mxu0 0
    %139 = vmatpush1.bf16.msra.mxu0 0
    %140 = vmatprep.subr.bf16.mxu0 0
    %141 = vmatpush1.bf16.msra.mxu0 0
    %142 = vmatprep.subr.bf16.mxu0 0
    %143 = vmatpush1.bf16.msra.mxu0 0
    %144 = vmatprep.subr.bf16.mxu0 0
    %145 = vmatpush1.bf16.msra.mxu0 0
    %146 = vmatprep.subr.bf16.mxu0 0
    %147 = vmatpush1.bf16.msra.mxu0 0
    %148 = vmatprep.subr.bf16.mxu0 0
    %149 = vmatpush1.bf16.msra.mxu0 0
    %150 = vmatprep.subr.bf16.mxu0 0
    %151 = vmatpush1.bf16.msra.mxu0 0
    %152 = vmatprep.subr.bf16.mxu0 0
    %153 = vmatpush1.bf16.msra.mxu0 0
    %154 = vmatprep.subr.bf16.mxu0 0
    %155 = vmatpush1.bf16.msra.mxu0 0
    %156 = vmatprep.mubr.bf16.mxu0 0
    %157 = vmatmul.mubr.bf16.gmra.mrb[0].mxu0 %v122
    %v158 = vpop.f32.mrb[0].mxu0
    %v159 = vadd.f32 0.0, %v158
    %v160 = vpop.f32.mrb[0].mxu0
    %v161 = vadd.f32 0.0, %v160
    %v162 = vpop.f32.mrb[0].mxu0
    %v163 = vpop.f32.mrb[0].mxu0
    %164 = vdwg.mxu0
    %165 = vmatprep.subr.bf16.mxu0 %v107
    %166 = vmatpush1.bf16.msra.mxu0 %v106
    %167 = vmatprep.subr.bf16.mxu0 %v111
    %168 = vmatpush1.bf16.msra.mxu0 %v110
    %169 = vmatprep.subr.bf16.mxu0 0
    %170 = vmatpush1.bf16.msra.mxu0 0
    %171 = vmatprep.subr.bf16.mxu0 0
    %172 = vmatpush1.bf16.msra.mxu0 0
    %173 = vmatprep.subr.bf16.mxu0 0
    %174 = vmatpush1.bf16.msra.mxu0 0
    %175 = vmatprep.subr.bf16.mxu0 0
    %176 = vmatpush1.bf16.msra.mxu0 0
    %177 = vmatprep.subr.bf16.mxu0 0
    %178 = vmatpush1.bf16.msra.mxu0 0
    %179 = vmatprep.subr.bf16.mxu0 0
    %180 = vmatpush1.bf16.msra.mxu0 0
    %181 = vmatprep.subr.bf16.mxu0 0
    %182 = vmatpush1.bf16.msra.mxu0 0
    %183 = vmatprep.subr.bf16.mxu0 0
    %184 = vmatpush1.bf16.msra.mxu0 0
    %185 = vmatprep.subr.bf16.mxu0 0
    %186 = vmatpush1.bf16.msra.mxu0 0
    %187 = vmatprep.subr.bf16.mxu0 0
    %188 = vmatpush1.bf16.msra.mxu0 0
    %189 = vmatprep.subr.bf16.mxu0 0
    %190 = vmatpush1.bf16.msra.mxu0 0
    %191 = vmatprep.subr.bf16.mxu0 0
    %192 = vmatpush1.bf16.msra.mxu0 0
    %193 = vmatprep.subr.bf16.mxu0 0
    %194 = vmatpush1.bf16.msra.mxu0 0
    %195 = vmatprep.subr.bf16.mxu0 0
    %196 = vmatpush1.bf16.msra.mxu0 0
    %197 = vmatprep.mubr.bf16.mxu0 0
    %198 = vmatmul.mubr.bf16.gmra.mrb[0].mxu0 %v122
    %v199 = vpop.f32.mrb[0].mxu0
    %v200 = vadd.f32 0.0, %v199
    %v201 = vpop.f32.mrb[0].mxu0
    %v202 = vadd.f32 0.0, %v201
    %v203 = vpop.f32.mrb[0].mxu0
    %v204 = vpop.f32.mrb[0].mxu0
    %205 = vdwg.mxu0
    %v206 = vrot.slane %v159, 4
    %v207 = vadd.f32 %v159, %v206
    %v208 = vrot.slane %v207, 2
    %v209 = vadd.f32 %v207, %v208
    %v210 = vrot.slane %v209, 1
    %v211 = vadd.f32 %v209, %v210
    %v212 = vrot.slane %v161, 4
    %v213 = vadd.f32 %v161, %v212
    %v214 = vrot.slane %v213, 2
    %v215 = vadd.f32 %v213, %v214
    %v216 = vrot.slane %v215, 1
    %v217 = vadd.f32 %v215, %v216
    %v218 = vrot.slane %v200, 4
    %v219 = vadd.f32 %v200, %v218
    %v220 = vrot.slane %v219, 2
    %v221 = vadd.f32 %v219, %v220
    %v222 = vrot.slane %v221, 1
    %v223 = vadd.f32 %v221, %v222
    %v224 = vrot.slane %v202, 4
    %v225 = vadd.f32 %v202, %v224
    %v226 = vrot.slane %v225, 2
    %v227 = vadd.f32 %v225, %v226
    %v228 = vrot.slane %v227, 1
    %v229 = vadd.f32 %v227, %v228
    %v230 = vmul.f32 %v211, 0.125
    %v231 = vmul.f32 %v217, 0.125
    %v232 = vmul.f32 %v223, 0.125
    %v233 = vmul.f32 %v229, 0.125
    %v234 = vmul.f32 %v159, %v159
    %v235 = vmul.f32 %v161, %v161
    %v236 = vmul.f32 %v200, %v200
    %v237 = vmul.f32 %v202, %v202
    %v238 = vrot.slane %v234, 4
    %v239 = vadd.f32 %v234, %v238
    %v240 = vrot.slane %v239, 2
    %v241 = vadd.f32 %v239, %v240
    %v242 = vrot.slane %v241, 1
    %v243 = vadd.f32 %v241, %v242
    %v244 = vrot.slane %v235, 4
    %v245 = vadd.f32 %v235, %v244
    %v246 = vrot.slane %v245, 2
    %v247 = vadd.f32 %v245, %v246
    %v248 = vrot.slane %v247, 1
    %v249 = vadd.f32 %v247, %v248
    %v250 = vrot.slane %v236, 4
    %v251 = vadd.f32 %v236, %v250
    %v252 = vrot.slane %v251, 2
    %v253 = vadd.f32 %v251, %v252
    %v254 = vrot.slane %v253, 1
    %v255 = vadd.f32 %v253, %v254
    %v256 = vrot.slane %v237, 4
    %v257 = vadd.f32 %v237, %v256
    %v258 = vrot.slane %v257, 2
    %v259 = vadd.f32 %v257, %v258
    %v260 = vrot.slane %v259, 1
    %v261 = vadd.f32 %v259, %v260
    %v262 = vmul.f32 %v243, 0.125
    %v263 = vmul.f32 %v249, 0.125
    %v264 = vmul.f32 %v255, 0.125
    %v265 = vmul.f32 %v261, 0.125
    %v266 = vmul.f32 %v230, %v230
    %v267 = vmul.f32 %v231, %v231
    %v268 = vmul.f32 %v232, %v232
    %v269 = vmul.f32 %v233, %v233
    %v270 = vsub.f32 %v262, %v266
    %v271 = vsub.f32 %v263, %v267
    %v272 = vsub.f32 %v264, %v268
    %v273 = vsub.f32 %v265, %v269
    %v274 = vmax.f32 %v270, 0.0
    %v275 = vmax.f32 %v271, 0.0
    %v276 = vmax.f32 %v272, 0.0
    %v277 = vmax.f32 %v273, 0.0
    %v278 = vld [vmem:[#allocation7] ss:$8 sm:$0xf]
    %s279 = scalar_lea.vmem [#allocation7], 1
    %v280 = vld [vmem:[%s279] ss:$8 sm:$0xf]
    %v281 = vsub.f32 %v159, %v230
    %v282 = vsub.f32 %v161, %v231
    %v283 = vsub.f32 %v200, %v232
    %v284 = vsub.f32 %v202, %v233
    %v285 = vadd.f32 %v274, 1e-05
    %v286 = vadd.f32 %v275, 1e-05
    %v287 = vadd.f32 %v276, 1e-05
    %v288 = vadd.f32 %v277, 1e-05
    %v289 = vrsqrt.pop %v285
    %v290 = vrsqrt.pop %v286
    %v291 = vrsqrt.pop %v287
    %v292 = vrsqrt.pop %v288
    %v294 = vlaneseq
    %v295 = vshrl.u32 %v294, 7
    %v296 = vsub.s32 0, %v295
    %v297 = vrot.slane %v278, %v296
    %v298 = vlaneseq
    %v299 = vshrl.u32 %v298, 7
    %v300 = vsub.s32 1, %v299
    %v301 = vrot.slane %v278, %v300
    %v302 = vlaneseq
    %v303 = vshrl.u32 %v302, 7
    %v304 = vsub.s32 2, %v303
    %v305 = vrot.slane %v278, %v304
    %v306 = vlaneseq
    %v307 = vshrl.u32 %v306, 7
    %v308 = vsub.s32 3, %v307
    %v309 = vrot.slane %v278, %v308
    %v314 = vmul.f32 %v289, %v297
    %v315 = vmul.f32 %v290, %v301
    %v316 = vmul.f32 %v291, %v305
    %v317 = vmul.f32 %v292, %v309
    %v318 = vlaneseq
    %v319 = vshrl.u32 %v318, 7
    %v320 = vsub.s32 0, %v319
    %v321 = vrot.slane %v314, %v320
    %v322 = vlaneseq
    %v323 = vshrl.u32 %v322, 7
    %v324 = vsub.s32 0, %v323
    %v325 = vrot.slane %v315, %v324
    %v326 = vlaneseq
    %v327 = vshrl.u32 %v326, 7
    %v328 = vsub.s32 0, %v327
    %v329 = vrot.slane %v316, %v328
    %v330 = vlaneseq
    %v331 = vshrl.u32 %v330, 7
    %v332 = vsub.s32 0, %v331
    %v333 = vrot.slane %v317, %v332
    %v334 = vmul.f32 %v281, %v321
    %v335 = vmul.f32 %v282, %v325
    %v336 = vmul.f32 %v283, %v329
    %v337 = vmul.f32 %v284, %v333
    %v339 = vlaneseq
    %v340 = vshrl.u32 %v339, 7
    %v341 = vsub.s32 0, %v340
    %v342 = vrot.slane %v280, %v341
    %v343 = vlaneseq
    %v344 = vshrl.u32 %v343, 7
    %v345 = vsub.s32 1, %v344
    %v346 = vrot.slane %v280, %v345
    %v347 = vlaneseq
    %v348 = vshrl.u32 %v347, 7
    %v349 = vsub.s32 2, %v348
    %v350 = vrot.slane %v280, %v349
    %v351 = vlaneseq
    %v352 = vshrl.u32 %v351, 7
    %v353 = vsub.s32 3, %v352
    %v354 = vrot.slane %v280, %v353
    %v359 = vadd.f32 %v334, %v342
    %v360 = vadd.f32 %v335, %v346
    %v361 = vadd.f32 %v336, %v350
    %v362 = vadd.f32 %v337, %v354
    %v363 = vmul.f32 %v359, 0.5
    %v364 = vmul.f32 %v360, 0.5
    %v365 = vmul.f32 %v361, 0.5
    %v366 = vmul.f32 %v362, 0.5
    %v367 = vmul.f32 %v359, 0.70710677
    %v368 = vmul.f32 %v360, 0.70710677
    %v369 = vmul.f32 %v361, 0.70710677
    %v370 = vmul.f32 %v362, 0.70710677
    %v371 = verf.f32.pop %v367
    %v372 = verf.f32.pop %v368
    %v373 = verf.f32.pop %v369
    %v374 = verf.f32.pop %v370
    %v375 = vadd.f32 %v371, 1.0
    %v376 = vadd.f32 %v372, 1.0
    %v377 = vadd.f32 %v373, 1.0
    %v378 = vadd.f32 %v374, 1.0
    %v379 = vmul.f32 %v363, %v375
    %v380 = vmul.f32 %v364, %v376
    %v381 = vmul.f32 %v365, %v377
    %v382 = vmul.f32 %v366, %v378
    %v383 = vpack.c.bf16 %v379, %v379
    %v384 = vpack.c.bf16 %v380, %v380
    %v385 = vpack.c.bf16 %v381, %v381
    %v386 = vpack.c.bf16 %v382, %v382
    %v387 = vld [vmem:[#allocation8] sm:$0xf]
    %v388 = vld [vmem:[#allocation8 + $0x4] sm:$0xf]
    %v389 = vld [vmem:[#allocation8 + $0x8] sm:$0xf]
    %v390 = vld [vmem:[#allocation8 + $0xc] sm:$0xf]
    %v391 = vld [vmem:[#allocation8 + $0x10] sm:$0xf]
    %v392 = vld [vmem:[#allocation8 + $0x14] sm:$0xf]
    %v393 = vld [vmem:[#allocation8 + $0x18] sm:$0xf]
    %v394 = vld [vmem:[#allocation8 + $0x1c] sm:$0xf]
    %v395 = vld [vmem:[#allocation8 + $0x20] sm:$0xf]
    %v396 = vld [vmem:[#allocation8 + $0x24] sm:$0xf]
    %v397 = vld [vmem:[#allocation8 + $0x28] sm:$0xf]
    %v398 = vld [vmem:[#allocation8 + $0x2c] sm:$0xf]
    %v399 = vld [vmem:[#allocation8 + $0x30] sm:$0xf]
    %v400 = vld [vmem:[#allocation8 + $0x34] sm:$0xf]
    %v401 = vld [vmem:[#allocation8 + $0x38] sm:$0xf]
    %v402 = vld [vmem:[#allocation8 + $0x3c] sm:$0xf]
    %v403 = vld [vmem:[#allocation8 + $0x40] sm:$0xf]
    %v404 = vld [vmem:[#allocation8 + $0x44] sm:$0xf]
    %v405 = vld [vmem:[#allocation8 + $0x48] sm:$0xf]
    %v406 = vld [vmem:[#allocation8 + $0x4c] sm:$0xf]
    %v407 = vld [vmem:[#allocation8 + $0x50] sm:$0xf]
    %v408 = vld [vmem:[#allocation8 + $0x54] sm:$0xf]
    %v409 = vld [vmem:[#allocation8 + $0x58] sm:$0xf]
    %v410 = vld [vmem:[#allocation8 + $0x5c] sm:$0xf]
    %v411 = vld [vmem:[#allocation8 + $0x60] sm:$0xf]
    %v412 = vld [vmem:[#allocation8 + $0x64] sm:$0xf]
    %v413 = vld [vmem:[#allocation8 + $0x68] sm:$0xf]
    %v414 = vld [vmem:[#allocation8 + $0x6c] sm:$0xf]
    %v415 = vld [vmem:[#allocation8 + $0x70] sm:$0xf]
    %v416 = vld [vmem:[#allocation8 + $0x74] sm:$0xf]
    %v417 = vld [vmem:[#allocation8 + $0x78] sm:$0xf]
    %v418 = vld [vmem:[#allocation8 + $0x7c] sm:$0xf]
    %v419 = vld [vmem:[#allocation8 + $0x80] sm:$0xf]
    %v420 = vld [vmem:[#allocation8 + $0x84] sm:$0xf]
    %v421 = vld [vmem:[#allocation8 + $0x88] sm:$0xf]
    %v422 = vld [vmem:[#allocation8 + $0x8c] sm:$0xf]
    %v423 = vld [vmem:[#allocation8 + $0x90] sm:$0xf]
    %v424 = vld [vmem:[#allocation8 + $0x94] sm:$0xf]
    %v425 = vld [vmem:[#allocation8 + $0x98] sm:$0xf]
    %v426 = vld [vmem:[#allocation8 + $0x9c] sm:$0xf]
    %v427 = vld [vmem:[#allocation8 + $0xa0] sm:$0xf]
    %v428 = vld [vmem:[#allocation8 + $0xa4] sm:$0xf]
    %v429 = vld [vmem:[#allocation8 + $0xa8] sm:$0xf]
    %v430 = vld [vmem:[#allocation8 + $0xac] sm:$0xf]
    %v431 = vld [vmem:[#allocation8 + $0xb0] sm:$0xf]
    %v432 = vld [vmem:[#allocation8 + $0xb4] sm:$0xf]
    %v433 = vld [vmem:[#allocation8 + $0xb8] sm:$0xf]
    %v434 = vld [vmem:[#allocation8 + $0xbc] sm:$0xf]
    %v435 = vld [vmem:[#allocation8 + $0xc0] sm:$0xf]
    %v436 = vld [vmem:[#allocation8 + $0xc4] sm:$0xf]
    %v437 = vld [vmem:[#allocation8 + $0xc8] sm:$0xf]
    %v438 = vld [vmem:[#allocation8 + $0xcc] sm:$0xf]
    %v439 = vld [vmem:[#allocation8 + $0xd0] sm:$0xf]
    %v440 = vld [vmem:[#allocation8 + $0xd4] sm:$0xf]
    %v441 = vld [vmem:[#allocation8 + $0xd8] sm:$0xf]
    %v442 = vld [vmem:[#allocation8 + $0xdc] sm:$0xf]
    %v443 = vld [vmem:[#allocation8 + $0xe0] sm:$0xf]
    %v444 = vld [vmem:[#allocation8 + $0xe4] sm:$0xf]
    %v445 = vld [vmem:[#allocation8 + $0xe8] sm:$0xf]
    %v446 = vld [vmem:[#allocation8 + $0xec] sm:$0xf]
    %v447 = vld [vmem:[#allocation8 + $0xf0] sm:$0xf]
    %v448 = vld [vmem:[#allocation8 + $0xf4] sm:$0xf]
    %v449 = vld [vmem:[#allocation8 + $0xf8] sm:$0xf]
    %v450 = vld [vmem:[#allocation8 + $0xfc] sm:$0xf]
    %v451 = vld [vmem:[#allocation7 + $0x2] ss:$0 sm:$0xff]
    %v516 = vunpack.c.l.b16 %v387
    %v517 = vunpack.c.l.b16 %v388
    %v518 = vunpack.c.l.b16 %v389
    %v519 = vunpack.c.l.b16 %v390
    %v520 = vunpack.c.l.b16 %v391
    %v521 = vunpack.c.l.b16 %v392
    %v522 = vunpack.c.l.b16 %v393
    %v523 = vunpack.c.l.b16 %v394
    %v524 = vunpack.c.l.b16 %v395
    %v525 = vunpack.c.l.b16 %v396
    %v526 = vunpack.c.l.b16 %v397
    %v527 = vunpack.c.l.b16 %v398
    %v528 = vunpack.c.l.b16 %v399
    %v529 = vunpack.c.l.b16 %v400
    %v530 = vunpack.c.l.b16 %v401
    %v531 = vunpack.c.l.b16 %v402
    %v532 = vunpack.c.l.b16 %v403
    %v533 = vunpack.c.l.b16 %v404
    %v534 = vunpack.c.l.b16 %v405
    %v535 = vunpack.c.l.b16 %v406
    %v536 = vunpack.c.l.b16 %v407
    %v537 = vunpack.c.l.b16 %v408
    %v538 = vunpack.c.l.b16 %v409
    %v539 = vunpack.c.l.b16 %v410
    %v540 = vunpack.c.l.b16 %v411
    %v541 = vunpack.c.l.b16 %v412
    %v542 = vunpack.c.l.b16 %v413
    %v543 = vunpack.c.l.b16 %v414
    %v544 = vunpack.c.l.b16 %v415
    %v545 = vunpack.c.l.b16 %v416
    %v546 = vunpack.c.l.b16 %v417
    %v547 = vunpack.c.l.b16 %v418
    %v548 = vunpack.c.l.b16 %v419
    %v549 = vunpack.c.l.b16 %v420
    %v550 = vunpack.c.l.b16 %v421
    %v551 = vunpack.c.l.b16 %v422
    %v552 = vunpack.c.l.b16 %v423
    %v553 = vunpack.c.l.b16 %v424
    %v554 = vunpack.c.l.b16 %v425
    %v555 = vunpack.c.l.b16 %v426
    %v556 = vunpack.c.l.b16 %v427
    %v557 = vunpack.c.l.b16 %v428
    %v558 = vunpack.c.l.b16 %v429
    %v559 = vunpack.c.l.b16 %v430
    %v560 = vunpack.c.l.b16 %v431
    %v561 = vunpack.c.l.b16 %v432
    %v562 = vunpack.c.l.b16 %v433
    %v563 = vunpack.c.l.b16 %v434
    %v564 = vunpack.c.l.b16 %v435
    %v565 = vunpack.c.l.b16 %v436
    %v566 = vunpack.c.l.b16 %v437
    %v567 = vunpack.c.l.b16 %v438
    %v568 = vunpack.c.l.b16 %v439
    %v569 = vunpack.c.l.b16 %v440
    %v570 = vunpack.c.l.b16 %v441
    %v571 = vunpack.c.l.b16 %v442
    %v572 = vunpack.c.l.b16 %v443
    %v573 = vunpack.c.l.b16 %v444
    %v574 = vunpack.c.l.b16 %v445
    %v575 = vunpack.c.l.b16 %v446
    %v576 = vunpack.c.l.b16 %v447
    %v577 = vunpack.c.l.b16 %v448
    %v578 = vunpack.c.l.b16 %v449
    %v579 = vunpack.c.l.b16 %v450
    %v580 = vpack.c.b16 %v517, %v516
    %v581 = vpack.c.b16 %v519, %v518
    %v582 = vpack.c.b16 %v521, %v520
    %v583 = vpack.c.b16 %v523, %v522
    %v584 = vpack.c.b16 %v525, %v524
    %v585 = vpack.c.b16 %v527, %v526
    %v586 = vpack.c.b16 %v529, %v528
    %v587 = vpack.c.b16 %v531, %v530
    %v588 = vpack.c.b16 %v533, %v532
    %v589 = vpack.c.b16 %v535, %v534
    %v590 = vpack.c.b16 %v537, %v536
    %v591 = vpack.c.b16 %v539, %v538
    %v592 = vpack.c.b16 %v541, %v540
    %v593 = vpack.c.b16 %v543, %v542
    %v594 = vpack.c.b16 %v545, %v544
    %v595 = vpack.c.b16 %v547, %v546
    %v596 = vpack.c.b16 %v549, %v548
    %v597 = vpack.c.b16 %v551, %v550
    %v598 = vpack.c.b16 %v553, %v552
    %v599 = vpack.c.b16 %v555, %v554
    %v600 = vpack.c.b16 %v557, %v556
    %v601 = vpack.c.b16 %v559, %v558
    %v602 = vpack.c.b16 %v561, %v560
    %v603 = vpack.c.b16 %v563, %v562
    %v604 = vpack.c.b16 %v565, %v564
    %v605 = vpack.c.b16 %v567, %v566
    %v606 = vpack.c.b16 %v569, %v568
    %v607 = vpack.c.b16 %v571, %v570
    %v608 = vpack.c.b16 %v573, %v572
    %v609 = vpack.c.b16 %v575, %v574
    %v610 = vpack.c.b16 %v577, %v576
    %v611 = vpack.c.b16 %v579, %v578
    %644 = vmatprep.subr.bf16.mxu0 0
    %645 = vmatpush1.bf16.msra.mxu0 %v580
    %646 = vmatprep.subr.bf16.mxu0 0
    %647 = vmatpush1.bf16.msra.mxu0 %v581
    %648 = vmatprep.subr.bf16.mxu0 0
    %649 = vmatpush1.bf16.msra.mxu0 %v582
    %650 = vmatprep.subr.bf16.mxu0 0
    %651 = vmatpush1.bf16.msra.mxu0 %v583
    %652 = vmatprep.subr.bf16.mxu0 0
    %653 = vmatpush1.bf16.msra.mxu0 %v584
    %654 = vmatprep.subr.bf16.mxu0 0
    %655 = vmatpush1.bf16.msra.mxu0 %v585
    %656 = vmatprep.subr.bf16.mxu0 0
    %657 = vmatpush1.bf16.msra.mxu0 %v586
    %658 = vmatprep.subr.bf16.mxu0 0
    %659 = vmatpush1.bf16.msra.mxu0 %v587
    %660 = vmatprep.subr.bf16.mxu0 0
    %661 = vmatpush1.bf16.msra.mxu0 %v588
    %662 = vmatprep.subr.bf16.mxu0 0
    %663 = vmatpush1.bf16.msra.mxu0 %v589
    %664 = vmatprep.subr.bf16.mxu0 0
    %665 = vmatpush1.bf16.msra.mxu0 %v590
    %666 = vmatprep.subr.bf16.mxu0 0
    %667 = vmatpush1.bf16.msra.mxu0 %v591
    %668 = vmatprep.subr.bf16.mxu0 0
    %669 = vmatpush1.bf16.msra.mxu0 %v592
    %670 = vmatprep.subr.bf16.mxu0 0
    %671 = vmatpush1.bf16.msra.mxu0 %v593
    %672 = vmatprep.subr.bf16.mxu0 0
    %673 = vmatpush1.bf16.msra.mxu0 %v594
    %674 = vmatprep.subr.bf16.mxu0 0
    %675 = vmatpush1.bf16.msra.mxu0 %v595
    %676 = vmatprep.mubr.bf16.mxu0 %v384
    %677 = vmatmul.mubr.bf16.gmra.mrb[0].mxu0 %v383
    %v678 = vpop.f32.mrb[0].mxu0
    %v679 = vadd.f32 %v451, %v678
    %v680 = vpop.f32.mrb[0].mxu0
    %v681 = vpop.f32.mrb[0].mxu0
    %v682 = vpop.f32.mrb[0].mxu0
    %683 = vdwg.mxu0
    %684 = vmatprep.subr.bf16.mxu0 0
    %685 = vmatpush1.bf16.msra.mxu0 %v596
    %686 = vmatprep.subr.bf16.mxu0 0
    %687 = vmatpush1.bf16.msra.mxu0 %v597
    %688 = vmatprep.subr.bf16.mxu0 0
    %689 = vmatpush1.bf16.msra.mxu0 %v598
    %690 = vmatprep.subr.bf16.mxu0 0
    %691 = vmatpush1.bf16.msra.mxu0 %v599
    %692 = vmatprep.subr.bf16.mxu0 0
    %693 = vmatpush1.bf16.msra.mxu0 %v600
    %694 = vmatprep.subr.bf16.mxu0 0
    %695 = vmatpush1.bf16.msra.mxu0 %v601
    %696 = vmatprep.subr.bf16.mxu0 0
    %697 = vmatpush1.bf16.msra.mxu0 %v602
    %698 = vmatprep.subr.bf16.mxu0 0
    %699 = vmatpush1.bf16.msra.mxu0 %v603
    %700 = vmatprep.subr.bf16.mxu0 0
    %701 = vmatpush1.bf16.msra.mxu0 %v604
    %702 = vmatprep.subr.bf16.mxu0 0
    %703 = vmatpush1.bf16.msra.mxu0 %v605
    %704 = vmatprep.subr.bf16.mxu0 0
    %705 = vmatpush1.bf16.msra.mxu0 %v606
    %706 = vmatprep.subr.bf16.mxu0 0
    %707 = vmatpush1.bf16.msra.mxu0 %v607
    %708 = vmatprep.subr.bf16.mxu0 0
    %709 = vmatpush1.bf16.msra.mxu0 %v608
    %710 = vmatprep.subr.bf16.mxu0 0
    %711 = vmatpush1.bf16.msra.mxu0 %v609
    %712 = vmatprep.subr.bf16.mxu0 0
    %713 = vmatpush1.bf16.msra.mxu0 %v610
    %714 = vmatprep.subr.bf16.mxu0 0
    %715 = vmatpush1.bf16.msra.mxu0 %v611
    %716 = vmatprep.mubr.bf16.mxu0 %v386
    %717 = vmatmul.mubr.bf16.gmra.mrb[0].mxu0 %v385
    %v718 = vpop.f32.mrb[0].mxu0
    %v719 = vadd.f32 %v679, %v718
    %v720 = vpop.f32.mrb[0].mxu0
    %v721 = vpop.f32.mrb[0].mxu0
    %v722 = vpop.f32.mrb[0].mxu0
    %723 = vdwg.mxu0
    %724 = vst [vmem:[#allocation10] sm:$0xff] %v719
    // Predicated region
    $region34: #{tpu_custom_call.1} parent=1 // pred_check
      _
    $region35: #{tpu_custom_call.1} parent=1 // pred_check_branch
      %726 = sbr.rel (0) target = $region37
    $region36: #{tpu_custom_call.1} parent=1 // pred_region
      %s728 = ssub.s32 128, 128
      %729 = vsyncadd [#allocation4], %s728
      %s731 = sshll.u32 [#allocation10], 4
      %s732 = int_to_ptr.vmem [resolvable:$true] %s731
      %734 = dma.vmem_to_hbm [thread:$0]  %s732, 128, %s4, [#allocation4]
    $region37: #{tpu_custom_call.1} parent=1 // pred_fallthru
      _
    // Predicated region
    $region38: #{tpu_custom_call.1} parent=1 // pred_check
      _
    $region39: #{tpu_custom_call.1} parent=1 // pred_check_branch
      %736 = sbr.rel (0) target = $region41
    $region40: #{tpu_custom_call.1} parent=1 // pred_region
      %737 = dma.done [#allocation4], 128
    $region41: #{tpu_custom_call.1} parent=1 // pred_fallthru
      _
    %738 = vsyncpa [#allocation3], 1
    %739 = vsyncpa [#allocation6], 1
    %740 = vsyncpa [#allocation9], 1
    %741 = vsyncpa [#allocation4], 1

</llo_original>
